<compile_context>
chip_gen: v7x
topology: tpu7x:2x2x1
jax: 0.10.0
libtpu: 0.0.40
codegen_flags: <defaults>
</compile_context>

<pallas_src>
import functools

import jax
import jax.numpy as jnp
from jax.experimental import pallas as pl
from jax.experimental.pallas import tpu as pltpu

LN_EPS = 1e-5          # torch.nn.LayerNorm default
LEAKY_SLOPE = 0.01     # torch.nn.LeakyReLU default


def _round_up(x, m):
    return ((x + m - 1) // m) * m


def _leaky_relu(x):
    # x >= 0 -> x ; x < 0 -> 0.01*x  (maximum picks the larger, which is 0.01*x
    # for negative x). Single VALU op, no compare+select.
    return jnp.maximum(x, LEAKY_SLOPE * x)


# --------------------------------------------------------------------------
# Kernel
# --------------------------------------------------------------------------
def fc3_kernel(x_ref, w1_ref, b1_ref, w2_ref, b2_ref, o_ref,
               *, l_in_real, hidden_real):
    """One batch tile: LN1 -> Linear1 (bf16 MXU) -> LeakyReLU -> LN2 -> Linear2 -> LeakyReLU.

    LayerNorm gamma/beta are pre-folded into w/b (see prepare_params), so only
    the centering/normalization runs here. Feature axes are zero-padded to
    multiples of 128; padded weight rows/cols and bias entries are zero, so the
    padded columns contribute nothing to the matmuls, and the LN statistics
    (sum over padded width, divide by the *real* width) are exact because the
    padded x / h columns are exactly zero.
    """
    x = x_ref[...].astype(jnp.float32)                        # (TB, L_pad)

    # ---- LayerNorm 1 (one-pass stats over real width l_in_real) ----
    inv_n1 = 1.0 / float(l_in_real)
    mu1 = jnp.sum(x, axis=-1, keepdims=True) * inv_n1
    var1 = jnp.maximum(jnp.sum(x * x, axis=-1, keepdims=True) * inv_n1
                       - mu1 * mu1, 0.0)
    xn = (x - mu1) * jax.lax.rsqrt(var1 + LN_EPS)             # gamma/beta folded into w1/b1

    # ---- Linear 1 on MXU (bf16 operands, f32 accumulation) + LeakyReLU ----
    h = jnp.dot(xn.astype(jnp.bfloat16), w1_ref[...],
                preferred_element_type=jnp.float32) + b1_ref[...]
    h = _leaky_relu(h)                                        # (TB, H_pad); padded cols == 0

    # ---- LayerNorm 2 (real width = hidden_real) ----
    inv_n2 = 1.0 / float(hidden_real)
    mu2 = jnp.sum(h, axis=-1, keepdims=True) * inv_n2
    var2 = jnp.maximum(jnp.sum(h * h, axis=-1, keepdims=True) * inv_n2
                       - mu2 * mu2, 0.0)
    hn = (h - mu2) * jax.lax.rsqrt(var2 + LN_EPS)             # gamma/beta folded into w2/b2

    # ---- Linear 2 + LeakyReLU, lane-dense (TB, 128) bf16 store ----
    o = jnp.dot(hn.astype(jnp.bfloat16), w2_ref[...],
                preferred_element_type=jnp.float32) + b2_ref[...]
    o_ref[...] = _leaky_relu(o).astype(o_ref.dtype)


# --------------------------------------------------------------------------
# Tiling choice (per TPU generation)
# --------------------------------------------------------------------------
def _vmem_capacity_bytes():
    try:
        info = pltpu.get_tpu_info()
        cap = getattr(info, "vmem_capacity_bytes", None)
        if cap:
            return int(cap)
    except Exception:
        pass
    return 64 * 1024 * 1024   # conservative default (v7x per-TC VMEM)


def _choose_tb(batch, l_pad):
    """Batch tile (multiple of 16) + vmem limit, sized by VMEM capacity.

    v5e/v6e (128 MiB VMEM): up to 2048 rows, ~16 MiB double-buffered x budget.
    v7x     (64 MiB / TC):  up to 1024 rows, ~8 MiB budget (don't reuse v6e cfg).
    """
    cap = _vmem_capacity_bytes()
    if cap > 96 * 1024 * 1024:           # v5e / v6e class
        max_rows, budget, vmem_limit = 2048, 16 * 1024 * 1024, 80 * 1024 * 1024
    else:                                # v7x class (64 MiB per TensorCore)
        max_rows, budget, vmem_limit = 1024, 8 * 1024 * 1024, 44 * 1024 * 1024

    tb = min(max_rows, max(16, budget // (2 * l_pad * 4)))    # f32 x, double-buffered
    tb = max(16, (tb // 16) * 16)
    if batch < tb:
        tb = max(16, _round_up(batch, 16))
    return tb, vmem_limit


# --------------------------------------------------------------------------
# One-time parameter preparation (hoisted out of the forward hot path)
# --------------------------------------------------------------------------
def prepare_params(params, l_in):
    """Fold LayerNorm affine into the Linear layers, cast weights to bf16 and
    zero-pad everything to lane-dense (multiples of 128) shapes. Run once."""
    hidden = params["w1"].shape[1]
    out = params["w2"].shape[1]
    L = _round_up(l_in, 128)
    H = _round_up(hidden, 128)
    O = _round_up(out, 128)

    # Exact algebraic fold: LN(x) @ W + b == ((x-mu)*rsqrt) @ (g[:,None]*W) + (b + be@W)
    w1f = params["ln1_g"][:, None] * params["w1"]
    b1f = params["b1"] + params["ln1_b"] @ params["w1"]
    w2f = params["ln2_g"][:, None] * params["w2"]
    b2f = params["b2"] + params["ln2_b"] @ params["w2"]

    w1p = jnp.zeros((L, H), jnp.bfloat16).at[:l_in, :hidden].set(w1f.astype(jnp.bfloat16))
    b1p = jnp.zeros((1, H), jnp.float32).at[0, :hidden].set(b1f.astype(jnp.float32))
    w2p = jnp.zeros((H, O), jnp.bfloat16).at[:hidden, :out].set(w2f.astype(jnp.bfloat16))
    b2p = jnp.zeros((1, O), jnp.float32).at[0, :out].set(b2f.astype(jnp.float32))

    return {"w1": w1p, "b1": b1p, "w2": w2p, "b2": b2p,
            "l_in": l_in, "hidden": hidden, "out": out, "L": L, "H": H, "O": O}


# --------------------------------------------------------------------------
# Forward
# --------------------------------------------------------------------------
def fc3_forward(x, prep):
    """x: (B, ...) float32; prep: output of prepare_params (padded/folded params)."""
    B = x.shape[0]
    x_flat = x.reshape(B, -1).astype(jnp.float32)             # x.view(B, -1)
    l_in = x_flat.shape[1]
    assert l_in == prep["l_in"], (l_in, prep["l_in"])
    L, H, O = prep["L"], prep["H"], prep["O"]

    TB, vmem_limit = _choose_tb(B, L)
    B_pad = _round_up(B, TB)
    pad_b = B_pad - B
    pad_f = L - l_in

    if pad_b or pad_f:
        # Pad only what's missing (batch rows and/or feature cols); when the
        # shapes are already clean this is skipped entirely (zero-copy path).
        x_in = jnp.pad(x_flat, ((0, pad_b), (0, pad_f)))
    else:
        x_in = x_flat

    kernel = functools.partial(fc3_kernel,
                               l_in_real=l_in, hidden_real=prep["hidden"])

    def resident(shape):
        # Parameters: same block every grid step -> DMA'd once, stay in VMEM.
        return pl.BlockSpec(shape, lambda i: (0, 0))

    out_padded = pl.pallas_call(
        kernel,
        out_shape=jax.ShapeDtypeStruct((B_pad, O), jnp.bfloat16),
        grid_spec=pltpu.PrefetchScalarGridSpec(
            num_scalar_prefetch=0,
            grid=(B_pad // TB,),
            in_specs=[
                pl.BlockSpec((TB, L), lambda i: (i, 0)),      # x tile (pipelined)
                resident((L, H)), resident((1, H)),           # w1 (folded, bf16), b1
                resident((H, O)), resident((1, O)),           # w2 (folded, bf16), b2
            ],
            out_specs=pl.BlockSpec((TB, O), lambda i: (i, 0)),
        ),
        compiler_params=pltpu.CompilerParams(
            dimension_semantics=("parallel",),                # v7x: 2 TCs share the batch
            vmem_limit_bytes=vmem_limit,
        ),
    )(x_in, prep["w1"], prep["b1"], prep["w2"], prep["b2"])

    return out_padded[:B, :prep["out"]].astype(jnp.float32)


# --------------------------------------------------------------------------
# Pure-JAX reference + PyTorch-style init
# --------------------------------------------------------------------------
def fc3_reference(x, params):
    """Mirrors the PyTorch forward (bf16 MXU operands, f32 accumulation)."""
    def ln(v, g, b):
        mu = jnp.mean(v, axis=-1, keepdims=True)
        var = jnp.mean((v - mu) ** 2, axis=-1, keepdims=True)
        return (v - mu) * jax.lax.rsqrt(var + LN_EPS) * g + b

    B = x.shape[0]
    h = x.reshape(B, -1).astype(jnp.float32)
    h = ln(h, params["ln1_g"], params["ln1_b"])
    h = _leaky_relu(jnp.dot(h.astype(jnp.bfloat16),
                            params["w1"].astype(jnp.bfloat16),
                            preferred_element_type=jnp.float32) + params["b1"])
    h = ln(h, params["ln2_g"], params["ln2_b"])
    h = _leaky_relu(jnp.dot(h.astype(jnp.bfloat16),
                            params["w2"].astype(jnp.bfloat16),
                            preferred_element_type=jnp.float32) + params["b2"])
    return h


def init_params(key, l_in, hidden=200, out=3):
    """PyTorch-style uniform(-1/sqrt(fan_in), 1/sqrt(fan_in)) for Linear;
    ones/zeros for LayerNorm affine (nn.LayerNorm default)."""
    k1, k2, k3, k4 = jax.random.split(key, 4)
    s1 = 1.0 / jnp.sqrt(l_in)
    s2 = 1.0 / jnp.sqrt(hidden)
    return {
        "ln1_g": jnp.ones((l_in,), jnp.float32),
        "ln1_b": jnp.zeros((l_in,), jnp.float32),
        # stored as (in, out): kernel computes x @ w == torch's x @ W.T
        "w1": jax.random.uniform(k1, (l_in, hidden), jnp.float32, -s1, s1),
        "b1": jax.random.uniform(k2, (hidden,), jnp.float32, -s1, s1),
        "ln2_g": jnp.ones((hidden,), jnp.float32),
        "ln2_b": jnp.zeros((hidden,), jnp.float32),
        "w2": jax.random.uniform(k3, (hidden, out), jnp.float32, -s2, s2),
        "b2": jax.random.uniform(k4, (out,), jnp.float32, -s2, s2),
    }


if __name__ == "__main__":
    key = jax.random.PRNGKey(0)
    kx, kp = jax.random.split(key)

    # Small NCHW input: d_in = (4, 16, 16) -> l_in = 1024 ; dropout=0 -> identity.
    B, C, Hh, Ww = 2, 4, 16, 16
    x = jax.random.normal(kx, (B, C, Hh, Ww), jnp.float32)
    params = init_params(kp, l_in=C * Hh * Ww, hidden=200, out=3)

    prep = prepare_params(params, l_in=C * Hh * Ww)           # one-time prep
    out = jax.block_until_ready(fc3_forward(x, prep))
    ref = fc3_reference(x, params)

    assert out.shape == (B, 3), out.shape
    assert jnp.allclose(out, ref, atol=5e-3, rtol=5e-3), (out, ref)
    print("KERNEL_OK")
</pallas_src>

<mosaic_0001>
module attributes {stable_mosaic.version = 11 : i64} {
  func.func @fc3_kernel(%arg0: i32, %arg1: memref<16x1024xf32, #tpu.memory_space<vmem>>, %arg2: memref<1024x256xbf16, #tpu.memory_space<vmem>>, %arg3: memref<1x256xf32, #tpu.memory_space<vmem>>, %arg4: memref<256x128xbf16, #tpu.memory_space<vmem>>, %arg5: memref<1x128xf32, #tpu.memory_space<vmem>>, %arg6: memref<16x128xbf16, #tpu.memory_space<vmem>>) attributes {dimension_semantics = [#tpu.dimension_semantics<parallel>], iteration_bounds = array<i64: 1>, scalar_prefetch = 0 : i64, scratch_operands = 0 : i64, tpu.core_type = #tpu.core_type<tc>, window_params = [{transform_indices = @transform_0, window_bounds = array<i64: 16, 1024>}, {pipeline_mode = #tpu.pipeline_mode<synchronous>, transform_indices = @transform_1, window_bounds = array<i64: 1024, 256>}, {pipeline_mode = #tpu.pipeline_mode<synchronous>, transform_indices = @transform_2, window_bounds = array<i64: 1, 256>}, {pipeline_mode = #tpu.pipeline_mode<synchronous>, transform_indices = @transform_3, window_bounds = array<i64: 256, 128>}, {pipeline_mode = #tpu.pipeline_mode<synchronous>, transform_indices = @transform_4, window_bounds = array<i64: 1, 128>}, {transform_indices = @transform_5, window_bounds = array<i64: 16, 128>}]} {
    %c0 = arith.constant 0 : index
    %c0_0 = arith.constant 0 : index
    %0 = vector.load %arg1[%c0, %c0_0] : memref<16x1024xf32, #tpu.memory_space<vmem>>, vector<16x1024xf32>
    %cst = arith.constant dense<0.000000e+00> : vector<16xf32>
    %1 = vector.multi_reduction <add>, %0, %cst [1] : vector<16x1024xf32> to vector<16xf32>
    %2 = vector.shape_cast %1 : vector<16xf32> to vector<16x1xf32>
    %cst_1 = arith.constant 9.765625E-4 : f32
    %3 = vector.broadcast %cst_1 : f32 to vector<16x1xf32>
    %4 = arith.mulf %2, %3 : vector<16x1xf32>
    %5 = arith.mulf %0, %0 : vector<16x1024xf32>
    %cst_2 = arith.constant dense<0.000000e+00> : vector<16xf32>
    %6 = vector.multi_reduction <add>, %5, %cst_2 [1] : vector<16x1024xf32> to vector<16xf32>
    %7 = vector.shape_cast %6 : vector<16xf32> to vector<16x1xf32>
    %cst_3 = arith.constant 9.765625E-4 : f32
    %8 = vector.broadcast %cst_3 : f32 to vector<16x1xf32>
    %9 = arith.mulf %7, %8 : vector<16x1xf32>
    %10 = arith.mulf %4, %4 : vector<16x1xf32>
    %11 = arith.subf %9, %10 : vector<16x1xf32>
    %cst_4 = arith.constant 0.000000e+00 : f32
    %12 = vector.broadcast %cst_4 : f32 to vector<16x1xf32>
    %13 = arith.maximumf %11, %12 : vector<16x1xf32>
    %14 = vector.broadcast %4 : vector<16x1xf32> to vector<16x1024xf32>
    %15 = arith.subf %0, %14 : vector<16x1024xf32>
    %cst_5 = arith.constant 9.99999974E-6 : f32
    %16 = vector.broadcast %cst_5 : f32 to vector<16x1xf32>
    %17 = arith.addf %13, %16 : vector<16x1xf32>
    %18 = math.rsqrt %17 : vector<16x1xf32>
    %19 = vector.broadcast %18 : vector<16x1xf32> to vector<16x1024xf32>
    %20 = arith.mulf %15, %19 : vector<16x1024xf32>
    %21 = arith.truncf %20 : vector<16x1024xf32> to vector<16x1024xbf16>
    %c0_6 = arith.constant 0 : index
    %c0_7 = arith.constant 0 : index
    %22 = vector.load %arg2[%c0_6, %c0_7] : memref<1024x256xbf16, #tpu.memory_space<vmem>>, vector<1024x256xbf16>
    %cst_8 = arith.constant dense<0.000000e+00> : vector<16x256xf32>
    %23 = tpu.matmul %21, %22, %cst_8 {dimension_numbers = #tpu.dot_dimension_numbers<[1], [0], [0], [1], [0, 0, 1, 1], [], []>} : vector<16x1024xbf16>, vector<1024x256xbf16>, vector<16x256xf32> -> vector<16x256xf32>
    %c0_9 = arith.constant 0 : index
    %c0_10 = arith.constant 0 : index
    %24 = vector.load %arg3[%c0_9, %c0_10] : memref<1x256xf32, #tpu.memory_space<vmem>>, vector<1x256xf32>
    %25 = vector.broadcast %24 : vector<1x256xf32> to vector<16x256xf32>
    %26 = arith.addf %23, %25 : vector<16x256xf32>
    %cst_11 = arith.constant 0.00999999977 : f32
    %27 = vector.broadcast %cst_11 : f32 to vector<16x256xf32>
    %28 = arith.mulf %27, %26 : vector<16x256xf32>
    %29 = arith.maximumf %26, %28 : vector<16x256xf32>
    %cst_12 = arith.constant dense<0.000000e+00> : vector<16xf32>
    %30 = vector.multi_reduction <add>, %29, %cst_12 [1] : vector<16x256xf32> to vector<16xf32>
    %31 = vector.shape_cast %30 : vector<16xf32> to vector<16x1xf32>
    %cst_13 = arith.constant 5.000000e-03 : f32
    %32 = vector.broadcast %cst_13 : f32 to vector<16x1xf32>
    %33 = arith.mulf %31, %32 : vector<16x1xf32>
    %34 = arith.mulf %29, %29 : vector<16x256xf32>
    %cst_14 = arith.constant dense<0.000000e+00> : vector<16xf32>
    %35 = vector.multi_reduction <add>, %34, %cst_14 [1] : vector<16x256xf32> to vector<16xf32>
    %36 = vector.shape_cast %35 : vector<16xf32> to vector<16x1xf32>
    %cst_15 = arith.constant 5.000000e-03 : f32
    %37 = vector.broadcast %cst_15 : f32 to vector<16x1xf32>
    %38 = arith.mulf %36, %37 : vector<16x1xf32>
    %39 = arith.mulf %33, %33 : vector<16x1xf32>
    %40 = arith.subf %38, %39 : vector<16x1xf32>
    %cst_16 = arith.constant 0.000000e+00 : f32
    %41 = vector.broadcast %cst_16 : f32 to vector<16x1xf32>
    %42 = arith.maximumf %40, %41 : vector<16x1xf32>
    %43 = vector.broadcast %33 : vector<16x1xf32> to vector<16x256xf32>
    %44 = arith.subf %29, %43 : vector<16x256xf32>
    %cst_17 = arith.constant 9.99999974E-6 : f32
    %45 = vector.broadcast %cst_17 : f32 to vector<16x1xf32>
    %46 = arith.addf %42, %45 : vector<16x1xf32>
    %47 = math.rsqrt %46 : vector<16x1xf32>
    %48 = vector.broadcast %47 : vector<16x1xf32> to vector<16x256xf32>
    %49 = arith.mulf %44, %48 : vector<16x256xf32>
    %50 = arith.truncf %49 : vector<16x256xf32> to vector<16x256xbf16>
    %c0_18 = arith.constant 0 : index
    %c0_19 = arith.constant 0 : index
    %51 = vector.load %arg4[%c0_18, %c0_19] : memref<256x128xbf16, #tpu.memory_space<vmem>>, vector<256x128xbf16>
    %cst_20 = arith.constant dense<0.000000e+00> : vector<16x128xf32>
    %52 = tpu.matmul %50, %51, %cst_20 {dimension_numbers = #tpu.dot_dimension_numbers<[1], [0], [0], [1], [0, 0, 1, 1], [], []>} : vector<16x256xbf16>, vector<256x128xbf16>, vector<16x128xf32> -> vector<16x128xf32>
    %c0_21 = arith.constant 0 : index
    %c0_22 = arith.constant 0 : index
    %53 = vector.load %arg5[%c0_21, %c0_22] : memref<1x128xf32, #tpu.memory_space<vmem>>, vector<1x128xf32>
    %54 = vector.broadcast %53 : vector<1x128xf32> to vector<16x128xf32>
    %55 = arith.addf %52, %54 : vector<16x128xf32>
    %cst_23 = arith.constant 0.00999999977 : f32
    %56 = vector.broadcast %cst_23 : f32 to vector<16x128xf32>
    %57 = arith.mulf %56, %55 : vector<16x128xf32>
    %58 = arith.maximumf %55, %57 : vector<16x128xf32>
    %59 = arith.truncf %58 : vector<16x128xf32> to vector<16x128xbf16>
    %c0_24 = arith.constant 0 : index
    %c0_25 = arith.constant 0 : index
    %60 = vector.load %arg6[%c0_24, %c0_25] : memref<16x128xbf16, #tpu.memory_space<vmem>>, vector<16x128xbf16>
    tpu.vector_store %arg6[%c0_24, %c0_25], %59 {strides = array<i32>} : memref<16x128xbf16, #tpu.memory_space<vmem>>, vector<16x128xbf16>,
    return
  }
  func.func @transform_0(%arg0: i32) -> (i32, i32) {
    %c0_i32 = arith.constant 0 : i32
    %c0_i32_0 = arith.constant 0 : i32
    return %arg0, %c0_i32 : i32, i32
  }
  func.func @transform_1(%arg0: i32) -> (i32, i32) {
    %c0_i32 = arith.constant 0 : i32
    %c0_i32_0 = arith.constant 0 : i32
    %c0_i32_1 = arith.constant 0 : i32
    return %c0_i32, %c0_i32_0 : i32, i32
  }
  func.func @transform_2(%arg0: i32) -> (i32, i32) {
    %c0_i32 = arith.constant 0 : i32
    %c0_i32_0 = arith.constant 0 : i32
    %c0_i32_1 = arith.constant 0 : i32
    return %c0_i32, %c0_i32_0 : i32, i32
  }
  func.func @transform_3(%arg0: i32) -> (i32, i32) {
    %c0_i32 = arith.constant 0 : i32
    %c0_i32_0 = arith.constant 0 : i32
    %c0_i32_1 = arith.constant 0 : i32
    return %c0_i32, %c0_i32_0 : i32, i32
  }
  func.func @transform_4(%arg0: i32) -> (i32, i32) {
    %c0_i32 = arith.constant 0 : i32
    %c0_i32_0 = arith.constant 0 : i32
    %c0_i32_1 = arith.constant 0 : i32
    return %c0_i32, %c0_i32_0 : i32, i32
  }
  func.func @transform_5(%arg0: i32) -> (i32, i32) {
    %c0_i32 = arith.constant 0 : i32
    %c0_i32_0 = arith.constant 0 : i32
    return %arg0, %c0_i32 : i32, i32
  }
}

</mosaic_0001>

<llo_original>
// kernel: tpu_custom_call.1
$region0: #{tpu_custom_call.1}
  #allocation0 [shape = 'u32[]', space=smem, size = 0x4, offset = 0x4, fixed_abs, tag = 'smem constant byte address 0x4 - core index']
  #allocation1 [shape = 'u32[144,128]{1,0:T(1,128)}', space=vmem, size = 0x12000, scoped, tag = 'internal scratch']
  %s0 = inlined_call_operand.hbm [shape: f32[16,1024], index: 0, kind: input, shape index: {}]
  %s1 = inlined_call_operand.hbm [shape: bf16[1024,256], index: 1, kind: input, shape index: {}]
  %s2 = inlined_call_operand.vmem [shape: f32[1,256], index: 2, kind: input, shape index: {}]
  %s3 = inlined_call_operand.hbm [shape: bf16[256,128], index: 3, kind: input, shape index: {}]
  %s4 = inlined_call_operand.vmem [shape: f32[1,128], index: 4, kind: input, shape index: {}]
  %s5 = inlined_call_operand.hbm [shape: bf16[16,128], index: 5, kind: output, shape index: {}]
  %s6 = sld [smem:[#allocation0]]
  $region42: #{tpu_custom_call.1} parent=0
    _
  %s8 = ssub.s32 1, %s6
  %s9 = scalar_select 0, %s8, %s6
  $region1: #{tpu_custom_call.1} parent=0
    #allocation2 [shape = 'u8[65536]{0}', space=vmem, size = 0x10000, scoped, tag = 'input window, operand 0, single buffered']
    #allocation3 [shape = 's32[1]{0}', space=sflag, size = 0x4, scoped, tag = 'scoped memory for tpu_custom_call.1']
    #allocation4 [shape = 's32[1]{0}', space=sflag, size = 0x4, scoped, tag = 'scoped memory for tpu_custom_call.1']
    #allocation5 [shape = 'u8[524288]{0}', space=vmem, size = 0x80000, scoped, tag = 'input window, operand 1, single buffered']
    #allocation6 [shape = 's32[1]{0}', space=sflag, size = 0x4, scoped, tag = 'scoped memory for tpu_custom_call.1']
    #allocation7 [shape = 'u8[65536]{0}', space=vmem, size = 0x10000, scoped, tag = 'input window, operand 3, single buffered']
    #allocation8 [shape = 'u8[4096]{0}', space=vmem, size = 0x1000, scoped, tag = 'output window, operand 0, single buffered']
    %10 = vsyncpa [#allocation3], 0
    %11 = vsyncpa [#allocation6], 0
    %12 = vsyncpa [#allocation4], 0
    // Predicated region
    $region2: #{tpu_custom_call.1} parent=1 // pred_check
      _
    $region3: #{tpu_custom_call.1} parent=1 // pred_check_branch
      %14 = sbr.rel (0) target = $region5
    $region4: #{tpu_custom_call.1} parent=1 // pred_region
      %s16 = ssub.s32 2048, 2048
      %17 = vsyncadd [#allocation3], %s16
      %s18 = sshll.u32 [#allocation2], 4
      %s19 = int_to_ptr.vmem [resolvable:$true] %s18
      %24 = dma.hbm_to_vmem [thread:$0]  %s0, 2048, %s19, [#allocation3], 1024, 1024, 64
    $region5: #{tpu_custom_call.1} parent=1 // pred_fallthru
      _
    // Predicated region
    $region6: #{tpu_custom_call.1} parent=1 // pred_check
      _
    $region7: #{tpu_custom_call.1} parent=1 // pred_check_branch
      %26 = sbr.rel (0) target = $region9
    $region8: #{tpu_custom_call.1} parent=1 // pred_region
      %s28 = ssub.s32 16384, 16384
      %29 = vsyncadd [#allocation6], %s28
      %s30 = sshll.u32 [#allocation5], 4
      %s31 = int_to_ptr.vmem [resolvable:$true] %s30
      %36 = dma.hbm_to_vmem [thread:$0]  %s1, 16384, %s31, [#allocation6], 128, 128, 8
    $region9: #{tpu_custom_call.1} parent=1 // pred_fallthru
      _
    // Predicated region
    $region10: #{tpu_custom_call.1} parent=1 // pred_check
      _
    $region11: #{tpu_custom_call.1} parent=1 // pred_check_branch
      %38 = sbr.rel (0) target = $region13
    $region12: #{tpu_custom_call.1} parent=1 // pred_region
      _
    $region13: #{tpu_custom_call.1} parent=1 // pred_fallthru
      _
    // Predicated region
    $region14: #{tpu_custom_call.1} parent=1 // pred_check
      _
    $region15: #{tpu_custom_call.1} parent=1 // pred_check_branch
      %40 = sbr.rel (0) target = $region17
    $region16: #{tpu_custom_call.1} parent=1 // pred_region
      %s42 = ssub.s32 2048, 2048
      %43 = vsyncadd [#allocation6], %s42
      %s44 = sshll.u32 [#allocation7], 4
      %s45 = int_to_ptr.vmem [resolvable:$true] %s44
      %50 = dma.hbm_to_vmem [thread:$0]  %s3, 2048, %s45, [#allocation6], 64, 64, 4
    $region17: #{tpu_custom_call.1} parent=1 // pred_fallthru
      _
    // Predicated region
    $region18: #{tpu_custom_call.1} parent=1 // pred_check
      _
    $region19: #{tpu_custom_call.1} parent=1 // pred_check_branch
      %52 = sbr.rel (0) target = $region21
    $region20: #{tpu_custom_call.1} parent=1 // pred_region
      _
    $region21: #{tpu_custom_call.1} parent=1 // pred_fallthru
      _
    // Predicated region
    $region22: #{tpu_custom_call.1} parent=1 // pred_check
      _
    $region23: #{tpu_custom_call.1} parent=1 // pred_check_branch
      %54 = sbr.rel (0) target = $region25
    $region24: #{tpu_custom_call.1} parent=1 // pred_region
      %55 = dma.done [#allocation3], 2048
    $region25: #{tpu_custom_call.1} parent=1 // pred_fallthru
      _
    // Predicated region
    $region26: #{tpu_custom_call.1} parent=1 // pred_check
      _
    $region27: #{tpu_custom_call.1} parent=1 // pred_check_branch
      %57 = sbr.rel (0) target = $region29
    $region28: #{tpu_custom_call.1} parent=1 // pred_region
      %58 = dma.done [#allocation6], 16384
    $region29: #{tpu_custom_call.1} parent=1 // pred_fallthru
      _
    // Predicated region
    $region30: #{tpu_custom_call.1} parent=1 // pred_check
      _
    $region31: #{tpu_custom_call.1} parent=1 // pred_check_branch
      %60 = sbr.rel (0) target = $region33
    $region32: #{tpu_custom_call.1} parent=1 // pred_region
      %61 = dma.done [#allocation6], 2048
    $region33: #{tpu_custom_call.1} parent=1 // pred_fallthru
      _
    %v63 = vld [vmem:[#allocation2] sm:$0xff]
    %v64 = vld [vmem:[#allocation2 + $0x8] sm:$0xff]
    %v65 = vld [vmem:[#allocation2 + $0x10] sm:$0xff]
    %v66 = vld [vmem:[#allocation2 + $0x18] sm:$0xff]
    %v67 = vld [vmem:[#allocation2 + $0x20] sm:$0xff]
    %v68 = vld [vmem:[#allocation2 + $0x28] sm:$0xff]
    %v69 = vld [vmem:[#allocation2 + $0x30] sm:$0xff]
    %v70 = vld [vmem:[#allocation2 + $0x38] sm:$0xff]
    %v71 = vld [vmem:[#allocation2 + $0x40] sm:$0xff]
    %v72 = vld [vmem:[#allocation2 + $0x48] sm:$0xff]
    %v73 = vld [vmem:[#allocation2 + $0x50] sm:$0xff]
    %v74 = vld [vmem:[#allocation2 + $0x58] sm:$0xff]
    %v75 = vld [vmem:[#allocation2 + $0x60] sm:$0xff]
    %v76 = vld [vmem:[#allocation2 + $0x68] sm:$0xff]
    %v77 = vld [vmem:[#allocation2 + $0x70] sm:$0xff]
    %v78 = vld [vmem:[#allocation2 + $0x78] sm:$0xff]
    %v79 = vadd.f32 %v63, %v64
    %v80 = vadd.f32 %v79, %v65
    %v81 = vadd.f32 %v80, %v66
    %v82 = vadd.f32 %v81, %v67
    %v83 = vadd.f32 %v82, %v68
    %v84 = vadd.f32 %v83, %v69
    %v85 = vadd.f32 %v84, %v70
    %86 = vadd.xlane.f32.xlu0 %v85
    %v87 = vpop.xlane.xlu0 %86
    %v88 = vadd.f32 %v71, %v72
    %v89 = vadd.f32 %v88, %v73
    %v90 = vadd.f32 %v89, %v74
    %v91 = vadd.f32 %v90, %v75
    %v92 = vadd.f32 %v91, %v76
    %v93 = vadd.f32 %v92, %v77
    %v94 = vadd.f32 %v93, %v78
    %95 = vadd.xlane.f32.xlu0 %v94
    %v96 = vpop.xlane.xlu0 %95
    %v97 = vmul.f32 %v87, 0.0009765625
    %v98 = vmul.f32 %v96, 0.0009765625
    %v99 = vmul.f32 %v63, %v63
    %v100 = vmul.f32 %v64, %v64
    %v101 = vmul.f32 %v65, %v65
    %v102 = vmul.f32 %v66, %v66
    %v103 = vmul.f32 %v67, %v67
    %v104 = vmul.f32 %v68, %v68
    %v105 = vmul.f32 %v69, %v69
    %v106 = vmul.f32 %v70, %v70
    %v107 = vmul.f32 %v71, %v71
    %v108 = vmul.f32 %v72, %v72
    %v109 = vmul.f32 %v73, %v73
    %v110 = vmul.f32 %v74, %v74
    %v111 = vmul.f32 %v75, %v75
    %v112 = vmul.f32 %v76, %v76
    %v113 = vmul.f32 %v77, %v77
    %v114 = vmul.f32 %v78, %v78
    %v115 = vadd.f32 %v99, %v100
    %v116 = vadd.f32 %v115, %v101
    %v117 = vadd.f32 %v116, %v102
    %v118 = vadd.f32 %v117, %v103
    %v119 = vadd.f32 %v118, %v104
    %v120 = vadd.f32 %v119, %v105
    %v121 = vadd.f32 %v120, %v106
    %122 = vadd.xlane.f32.xlu0 %v121
    %v123 = vpop.xlane.xlu0 %122
    %v124 = vadd.f32 %v107, %v108
    %v125 = vadd.f32 %v124, %v109
    %v126 = vadd.f32 %v125, %v110
    %v127 = vadd.f32 %v126, %v111
    %v128 = vadd.f32 %v127, %v112
    %v129 = vadd.f32 %v128, %v113
    %v130 = vadd.f32 %v129, %v114
    %131 = vadd.xlane.f32.xlu0 %v130
    %v132 = vpop.xlane.xlu0 %131
    %v133 = vmul.f32 %v123, 0.0009765625
    %v134 = vmul.f32 %v132, 0.0009765625
    %v135 = vmul.f32 %v97, %v97
    %v136 = vmul.f32 %v98, %v98
    %v137 = vsub.f32 %v133, %v135
    %v138 = vsub.f32 %v134, %v136
    %v139 = vmax.f32 %v137, 0.0
    %v140 = vmax.f32 %v138, 0.0
    %v141 = vsub.f32 %v63, %v97
    %v142 = vsub.f32 %v64, %v97
    %v143 = vsub.f32 %v65, %v97
    %v144 = vsub.f32 %v66, %v97
    %v145 = vsub.f32 %v67, %v97
    %v146 = vsub.f32 %v68, %v97
    %v147 = vsub.f32 %v69, %v97
    %v148 = vsub.f32 %v70, %v97
    %v149 = vsub.f32 %v71, %v98
    %v150 = vsub.f32 %v72, %v98
    %v151 = vsub.f32 %v73, %v98
    %v152 = vsub.f32 %v74, %v98
    %v153 = vsub.f32 %v75, %v98
    %v154 = vsub.f32 %v76, %v98
    %v155 = vsub.f32 %v77, %v98
    %v156 = vsub.f32 %v78, %v98
    %v157 = vadd.f32 %v139, 1e-05
    %v158 = vadd.f32 %v140, 1e-05
    %v159 = vrsqrt.pop %v157
    %v160 = vrsqrt.pop %v158
    %v161 = vmul.f32 %v141, %v159
    %v162 = vmul.f32 %v142, %v159
    %v163 = vmul.f32 %v143, %v159
    %v164 = vmul.f32 %v144, %v159
    %v165 = vmul.f32 %v145, %v159
    %v166 = vmul.f32 %v146, %v159
    %v167 = vmul.f32 %v147, %v159
    %v168 = vmul.f32 %v148, %v159
    %v169 = vmul.f32 %v149, %v160
    %v170 = vmul.f32 %v150, %v160
    %v171 = vmul.f32 %v151, %v160
    %v172 = vmul.f32 %v152, %v160
    %v173 = vmul.f32 %v153, %v160
    %v174 = vmul.f32 %v154, %v160
    %v175 = vmul.f32 %v155, %v160
    %v176 = vmul.f32 %v156, %v160
    %v177 = vpack.c.bf16 %v169, %v161
    %v178 = vpack.c.bf16 %v170, %v162
    %v179 = vpack.c.bf16 %v171, %v163
    %v180 = vpack.c.bf16 %v172, %v164
    %v181 = vpack.c.bf16 %v173, %v165
    %v182 = vpack.c.bf16 %v174, %v166
    %v183 = vpack.c.bf16 %v175, %v167
    %v184 = vpack.c.bf16 %v176, %v168
    %v185 = vld [vmem:[#allocation5] sm:$0xff]
    %v186 = vld [vmem:[#allocation5 + $0x8] sm:$0xff]
    %v187 = vld [vmem:[#allocation5 + $0x10] sm:$0xff]
    %v188 = vld [vmem:[#allocation5 + $0x18] sm:$0xff]
    %v189 = vld [vmem:[#allocation5 + $0x20] sm:$0xff]
    %v190 = vld [vmem:[#allocation5 + $0x28] sm:$0xff]
    %v191 = vld [vmem:[#allocation5 + $0x30] sm:$0xff]
    %v192 = vld [vmem:[#allocation5 + $0x38] sm:$0xff]
    %v193 = vld [vmem:[#allocation5 + $0x40] sm:$0xff]
    %v194 = vld [vmem:[#allocation5 + $0x48] sm:$0xff]
    %v195 = vld [vmem:[#allocation5 + $0x50] sm:$0xff]
    %v196 = vld [vmem:[#allocation5 + $0x58] sm:$0xff]
    %v197 = vld [vmem:[#allocation5 + $0x60] sm:$0xff]
    %v198 = vld [vmem:[#allocation5 + $0x68] sm:$0xff]
    %v199 = vld [vmem:[#allocation5 + $0x70] sm:$0xff]
    %v200 = vld [vmem:[#allocation5 + $0x78] sm:$0xff]
    %v201 = vld [vmem:[#allocation5 + $0x80] sm:$0xff]
    %v202 = vld [vmem:[#allocation5 + $0x88] sm:$0xff]
    %v203 = vld [vmem:[#allocation5 + $0x90] sm:$0xff]
    %v204 = vld [vmem:[#allocation5 + $0x98] sm:$0xff]
    %v205 = vld [vmem:[#allocation5 + $0xa0] sm:$0xff]
    %v206 = vld [vmem:[#allocation5 + $0xa8] sm:$0xff]
    %v207 = vld [vmem:[#allocation5 + $0xb0] sm:$0xff]
    %v208 = vld [vmem:[#allocation5 + $0xb8] sm:$0xff]
    %v209 = vld [vmem:[#allocation5 + $0xc0] sm:$0xff]
    %v210 = vld [vmem:[#allocation5 + $0xc8] sm:$0xff]
    %v211 = vld [vmem:[#allocation5 + $0xd0] sm:$0xff]
    %v212 = vld [vmem:[#allocation5 + $0xd8] sm:$0xff]
    %v213 = vld [vmem:[#allocation5 + $0xe0] sm:$0xff]
    %v214 = vld [vmem:[#allocation5 + $0xe8] sm:$0xff]
    %v215 = vld [vmem:[#allocation5 + $0xf0] sm:$0xff]
    %v216 = vld [vmem:[#allocation5 + $0xf8] sm:$0xff]
    %v217 = vld [vmem:[#allocation5 + $0x100] sm:$0xff]
    %v218 = vld [vmem:[#allocation5 + $0x108] sm:$0xff]
    %v219 = vld [vmem:[#allocation5 + $0x110] sm:$0xff]
    %v220 = vld [vmem:[#allocation5 + $0x118] sm:$0xff]
    %v221 = vld [vmem:[#allocation5 + $0x120] sm:$0xff]
    %v222 = vld [vmem:[#allocation5 + $0x128] sm:$0xff]
    %v223 = vld [vmem:[#allocation5 + $0x130] sm:$0xff]
    %v224 = vld [vmem:[#allocation5 + $0x138] sm:$0xff]
    %v225 = vld [vmem:[#allocation5 + $0x140] sm:$0xff]
    %v226 = vld [vmem:[#allocation5 + $0x148] sm:$0xff]
    %v227 = vld [vmem:[#allocation5 + $0x150] sm:$0xff]
    %v228 = vld [vmem:[#allocation5 + $0x158] sm:$0xff]
    %v229 = vld [vmem:[#allocation5 + $0x160] sm:$0xff]
    %v230 = vld [vmem:[#allocation5 + $0x168] sm:$0xff]
    %v231 = vld [vmem:[#allocation5 + $0x170] sm:$0xff]
    %v232 = vld [vmem:[#allocation5 + $0x178] sm:$0xff]
    %v233 = vld [vmem:[#allocation5 + $0x180] sm:$0xff]
    %v234 = vld [vmem:[#allocation5 + $0x188] sm:$0xff]
    %v235 = vld [vmem:[#allocation5 + $0x190] sm:$0xff]
    %v236 = vld [vmem:[#allocation5 + $0x198] sm:$0xff]
    %v237 = vld [vmem:[#allocation5 + $0x1a0] sm:$0xff]
    %v238 = vld [vmem:[#allocation5 + $0x1a8] sm:$0xff]
    %v239 = vld [vmem:[#allocation5 + $0x1b0] sm:$0xff]
    %v240 = vld [vmem:[#allocation5 + $0x1b8] sm:$0xff]
    %v241 = vld [vmem:[#allocation5 + $0x1c0] sm:$0xff]
    %v242 = vld [vmem:[#allocation5 + $0x1c8] sm:$0xff]
    %v243 = vld [vmem:[#allocation5 + $0x1d0] sm:$0xff]
    %v244 = vld [vmem:[#allocation5 + $0x1d8] sm:$0xff]
    %v245 = vld [vmem:[#allocation5 + $0x1e0] sm:$0xff]
    %v246 = vld [vmem:[#allocation5 + $0x1e8] sm:$0xff]
    %v247 = vld [vmem:[#allocation5 + $0x1f0] sm:$0xff]
    %v248 = vld [vmem:[#allocation5 + $0x1f8] sm:$0xff]
    %v249 = vld [vmem:[#allocation5 + $0x200] sm:$0xff]
    %v250 = vld [vmem:[#allocation5 + $0x208] sm:$0xff]
    %v251 = vld [vmem:[#allocation5 + $0x210] sm:$0xff]
    %v252 = vld [vmem:[#allocation5 + $0x218] sm:$0xff]
    %v253 = vld [vmem:[#allocation5 + $0x220] sm:$0xff]
    %v254 = vld [vmem:[#allocation5 + $0x228] sm:$0xff]
    %v255 = vld [vmem:[#allocation5 + $0x230] sm:$0xff]
    %v256 = vld [vmem:[#allocation5 + $0x238] sm:$0xff]
    %v257 = vld [vmem:[#allocation5 + $0x240] sm:$0xff]
    %v258 = vld [vmem:[#allocation5 + $0x248] sm:$0xff]
    %v259 = vld [vmem:[#allocation5 + $0x250] sm:$0xff]
    %v260 = vld [vmem:[#allocation5 + $0x258] sm:$0xff]
    %v261 = vld [vmem:[#allocation5 + $0x260] sm:$0xff]
    %v262 = vld [vmem:[#allocation5 + $0x268] sm:$0xff]
    %v263 = vld [vmem:[#allocation5 + $0x270] sm:$0xff]
    %v264 = vld [vmem:[#allocation5 + $0x278] sm:$0xff]
    %v265 = vld [vmem:[#allocation5 + $0x280] sm:$0xff]
    %v266 = vld [vmem:[#allocation5 + $0x288] sm:$0xff]
    %v267 = vld [vmem:[#allocation5 + $0x290] sm:$0xff]
    %v268 = vld [vmem:[#allocation5 + $0x298] sm:$0xff]
    %v269 = vld [vmem:[#allocation5 + $0x2a0] sm:$0xff]
    %v270 = vld [vmem:[#allocation5 + $0x2a8] sm:$0xff]
    %v271 = vld [vmem:[#allocation5 + $0x2b0] sm:$0xff]
    %v272 = vld [vmem:[#allocation5 + $0x2b8] sm:$0xff]
    %v273 = vld [vmem:[#allocation5 + $0x2c0] sm:$0xff]
    %v274 = vld [vmem:[#allocation5 + $0x2c8] sm:$0xff]
    %v275 = vld [vmem:[#allocation5 + $0x2d0] sm:$0xff]
    %v276 = vld [vmem:[#allocation5 + $0x2d8] sm:$0xff]
    %v277 = vld [vmem:[#allocation5 + $0x2e0] sm:$0xff]
    %v278 = vld [vmem:[#allocation5 + $0x2e8] sm:$0xff]
    %v279 = vld [vmem:[#allocation5 + $0x2f0] sm:$0xff]
    %v280 = vld [vmem:[#allocation5 + $0x2f8] sm:$0xff]
    %v281 = vld [vmem:[#allocation5 + $0x300] sm:$0xff]
    %v282 = vld [vmem:[#allocation5 + $0x308] sm:$0xff]
    %v283 = vld [vmem:[#allocation5 + $0x310] sm:$0xff]
    %v284 = vld [vmem:[#allocation5 + $0x318] sm:$0xff]
    %v285 = vld [vmem:[#allocation5 + $0x320] sm:$0xff]
    %v286 = vld [vmem:[#allocation5 + $0x328] sm:$0xff]
    %v287 = vld [vmem:[#allocation5 + $0x330] sm:$0xff]
    %v288 = vld [vmem:[#allocation5 + $0x338] sm:$0xff]
    %v289 = vld [vmem:[#allocation5 + $0x340] sm:$0xff]
    %v290 = vld [vmem:[#allocation5 + $0x348] sm:$0xff]
    %v291 = vld [vmem:[#allocation5 + $0x350] sm:$0xff]
    %v292 = vld [vmem:[#allocation5 + $0x358] sm:$0xff]
    %v293 = vld [vmem:[#allocation5 + $0x360] sm:$0xff]
    %v294 = vld [vmem:[#allocation5 + $0x368] sm:$0xff]
    %v295 = vld [vmem:[#allocation5 + $0x370] sm:$0xff]
    %v296 = vld [vmem:[#allocation5 + $0x378] sm:$0xff]
    %v297 = vld [vmem:[#allocation5 + $0x380] sm:$0xff]
    %v298 = vld [vmem:[#allocation5 + $0x388] sm:$0xff]
    %v299 = vld [vmem:[#allocation5 + $0x390] sm:$0xff]
    %v300 = vld [vmem:[#allocation5 + $0x398] sm:$0xff]
    %v301 = vld [vmem:[#allocation5 + $0x3a0] sm:$0xff]
    %v302 = vld [vmem:[#allocation5 + $0x3a8] sm:$0xff]
    %v303 = vld [vmem:[#allocation5 + $0x3b0] sm:$0xff]
    %v304 = vld [vmem:[#allocation5 + $0x3b8] sm:$0xff]
    %v305 = vld [vmem:[#allocation5 + $0x3c0] sm:$0xff]
    %v306 = vld [vmem:[#allocation5 + $0x3c8] sm:$0xff]
    %v307 = vld [vmem:[#allocation5 + $0x3d0] sm:$0xff]
    %v308 = vld [vmem:[#allocation5 + $0x3d8] sm:$0xff]
    %v309 = vld [vmem:[#allocation5 + $0x3e0] sm:$0xff]
    %v310 = vld [vmem:[#allocation5 + $0x3e8] sm:$0xff]
    %v311 = vld [vmem:[#allocation5 + $0x3f0] sm:$0xff]
    %v312 = vld [vmem:[#allocation5 + $0x3f8] sm:$0xff]
    %v313 = vld [vmem:[%s2] sm:$0x3]
    %v315 = vlaneseq
    %v316 = vshrl.u32 %v315, 7
    %v317 = vsub.s32 0, %v316
    %v318 = vrot.slane %v313, %v317
    %v319 = vlaneseq
    %v320 = vshrl.u32 %v319, 7
    %v321 = vsub.s32 1, %v320
    %v322 = vrot.slane %v313, %v321
    %v453 = vunpack.c.l.b16 %v185
    %v454 = vunpack.c.h.b16 %v185
    %v455 = vunpack.c.l.b16 %v186
    %v456 = vunpack.c.h.b16 %v186
    %v457 = vunpack.c.l.b16 %v187
    %v458 = vunpack.c.h.b16 %v187
    %v459 = vunpack.c.l.b16 %v188
    %v460 = vunpack.c.h.b16 %v188
    %v461 = vunpack.c.l.b16 %v189
    %v462 = vunpack.c.h.b16 %v189
    %v463 = vunpack.c.l.b16 %v190
    %v464 = vunpack.c.h.b16 %v190
    %v465 = vunpack.c.l.b16 %v191
    %v466 = vunpack.c.h.b16 %v191
    %v467 = vunpack.c.l.b16 %v192
    %v468 = vunpack.c.h.b16 %v192
    %v469 = vunpack.c.l.b16 %v193
    %v470 = vunpack.c.h.b16 %v193
    %v471 = vunpack.c.l.b16 %v194
    %v472 = vunpack.c.h.b16 %v194
    %v473 = vunpack.c.l.b16 %v195
    %v474 = vunpack.c.h.b16 %v195
    %v475 = vunpack.c.l.b16 %v196
    %v476 = vunpack.c.h.b16 %v196
    %v477 = vunpack.c.l.b16 %v197
    %v478 = vunpack.c.h.b16 %v197
    %v479 = vunpack.c.l.b16 %v198
    %v480 = vunpack.c.h.b16 %v198
    %v481 = vunpack.c.l.b16 %v199
    %v482 = vunpack.c.h.b16 %v199
    %v483 = vunpack.c.l.b16 %v200
    %v484 = vunpack.c.h.b16 %v200
    %v485 = vunpack.c.l.b16 %v201
    %v486 = vunpack.c.h.b16 %v201
    %v487 = vunpack.c.l.b16 %v202
    %v488 = vunpack.c.h.b16 %v202
    %v489 = vunpack.c.l.b16 %v203
    %v490 = vunpack.c.h.b16 %v203
    %v491 = vunpack.c.l.b16 %v204
    %v492 = vunpack.c.h.b16 %v204
    %v493 = vunpack.c.l.b16 %v205
    %v494 = vunpack.c.h.b16 %v205
    %v495 = vunpack.c.l.b16 %v206
    %v496 = vunpack.c.h.b16 %v206
    %v497 = vunpack.c.l.b16 %v207
    %v498 = vunpack.c.h.b16 %v207
    %v499 = vunpack.c.l.b16 %v208
    %v500 = vunpack.c.h.b16 %v208
    %v501 = vunpack.c.l.b16 %v209
    %v502 = vunpack.c.h.b16 %v209
    %v503 = vunpack.c.l.b16 %v210
    %v504 = vunpack.c.h.b16 %v210
    %v505 = vunpack.c.l.b16 %v211
    %v506 = vunpack.c.h.b16 %v211
    %v507 = vunpack.c.l.b16 %v212
    %v508 = vunpack.c.h.b16 %v212
    %v509 = vunpack.c.l.b16 %v213
    %v510 = vunpack.c.h.b16 %v213
    %v511 = vunpack.c.l.b16 %v214
    %v512 = vunpack.c.h.b16 %v214
    %v513 = vunpack.c.l.b16 %v215
    %v514 = vunpack.c.h.b16 %v215
    %v515 = vunpack.c.l.b16 %v216
    %v516 = vunpack.c.h.b16 %v216
    %v517 = vunpack.c.l.b16 %v217
    %v518 = vunpack.c.h.b16 %v217
    %v519 = vunpack.c.l.b16 %v218
    %v520 = vunpack.c.h.b16 %v218
    %v521 = vunpack.c.l.b16 %v219
    %v522 = vunpack.c.h.b16 %v219
    %v523 = vunpack.c.l.b16 %v220
    %v524 = vunpack.c.h.b16 %v220
    %v525 = vunpack.c.l.b16 %v221
    %v526 = vunpack.c.h.b16 %v221
    %v527 = vunpack.c.l.b16 %v222
    %v528 = vunpack.c.h.b16 %v222
    %v529 = vunpack.c.l.b16 %v223
    %v530 = vunpack.c.h.b16 %v223
    %v531 = vunpack.c.l.b16 %v224
    %v532 = vunpack.c.h.b16 %v224
    %v533 = vunpack.c.l.b16 %v225
    %v534 = vunpack.c.h.b16 %v225
    %v535 = vunpack.c.l.b16 %v226
    %v536 = vunpack.c.h.b16 %v226
    %v537 = vunpack.c.l.b16 %v227
    %v538 = vunpack.c.h.b16 %v227
    %v539 = vunpack.c.l.b16 %v228
    %v540 = vunpack.c.h.b16 %v228
    %v541 = vunpack.c.l.b16 %v229
    %v542 = vunpack.c.h.b16 %v229
    %v543 = vunpack.c.l.b16 %v230
    %v544 = vunpack.c.h.b16 %v230
    %v545 = vunpack.c.l.b16 %v231
    %v546 = vunpack.c.h.b16 %v231
    %v547 = vunpack.c.l.b16 %v232
    %v548 = vunpack.c.h.b16 %v232
    %v549 = vunpack.c.l.b16 %v233
    %v550 = vunpack.c.h.b16 %v233
    %v551 = vunpack.c.l.b16 %v234
    %v552 = vunpack.c.h.b16 %v234
    %v553 = vunpack.c.l.b16 %v235
    %v554 = vunpack.c.h.b16 %v235
    %v555 = vunpack.c.l.b16 %v236
    %v556 = vunpack.c.h.b16 %v236
    %v557 = vunpack.c.l.b16 %v237
    %v558 = vunpack.c.h.b16 %v237
    %v559 = vunpack.c.l.b16 %v238
    %v560 = vunpack.c.h.b16 %v238
    %v561 = vunpack.c.l.b16 %v239
    %v562 = vunpack.c.h.b16 %v239
    %v563 = vunpack.c.l.b16 %v240
    %v564 = vunpack.c.h.b16 %v240
    %v565 = vunpack.c.l.b16 %v241
    %v566 = vunpack.c.h.b16 %v241
    %v567 = vunpack.c.l.b16 %v242
    %v568 = vunpack.c.h.b16 %v242
    %v569 = vunpack.c.l.b16 %v243
    %v570 = vunpack.c.h.b16 %v243
    %v571 = vunpack.c.l.b16 %v244
    %v572 = vunpack.c.h.b16 %v244
    %v573 = vunpack.c.l.b16 %v245
    %v574 = vunpack.c.h.b16 %v245
    %v575 = vunpack.c.l.b16 %v246
    %v576 = vunpack.c.h.b16 %v246
    %v577 = vunpack.c.l.b16 %v247
    %v578 = vunpack.c.h.b16 %v247
    %v579 = vunpack.c.l.b16 %v248
    %v580 = vunpack.c.h.b16 %v248
    %v581 = vunpack.c.l.b16 %v249
    %v582 = vunpack.c.h.b16 %v249
    %v583 = vunpack.c.l.b16 %v250
    %v584 = vunpack.c.h.b16 %v250
    %v585 = vunpack.c.l.b16 %v251
    %v586 = vunpack.c.h.b16 %v251
    %v587 = vunpack.c.l.b16 %v252
    %v588 = vunpack.c.h.b16 %v252
    %v589 = vunpack.c.l.b16 %v253
    %v590 = vunpack.c.h.b16 %v253
    %v591 = vunpack.c.l.b16 %v254
    %v592 = vunpack.c.h.b16 %v254
    %v593 = vunpack.c.l.b16 %v255
    %v594 = vunpack.c.h.b16 %v255
    %v595 = vunpack.c.l.b16 %v256
    %v596 = vunpack.c.h.b16 %v256
    %v597 = vunpack.c.l.b16 %v257
    %v598 = vunpack.c.h.b16 %v257
    %v599 = vunpack.c.l.b16 %v258
    %v600 = vunpack.c.h.b16 %v258
    %v601 = vunpack.c.l.b16 %v259
    %v602 = vunpack.c.h.b16 %v259
    %v603 = vunpack.c.l.b16 %v260
    %v604 = vunpack.c.h.b16 %v260
    %v605 = vunpack.c.l.b16 %v261
    %v606 = vunpack.c.h.b16 %v261
    %v607 = vunpack.c.l.b16 %v262
    %v608 = vunpack.c.h.b16 %v262
    %v609 = vunpack.c.l.b16 %v263
    %v610 = vunpack.c.h.b16 %v263
    %v611 = vunpack.c.l.b16 %v264
    %v612 = vunpack.c.h.b16 %v264
    %v613 = vunpack.c.l.b16 %v265
    %v614 = vunpack.c.h.b16 %v265
    %v615 = vunpack.c.l.b16 %v266
    %v616 = vunpack.c.h.b16 %v266
    %v617 = vunpack.c.l.b16 %v267
    %v618 = vunpack.c.h.b16 %v267
    %v619 = vunpack.c.l.b16 %v268
    %v620 = vunpack.c.h.b16 %v268
    %v621 = vunpack.c.l.b16 %v269
    %v622 = vunpack.c.h.b16 %v269
    %v623 = vunpack.c.l.b16 %v270
    %v624 = vunpack.c.h.b16 %v270
    %v625 = vunpack.c.l.b16 %v271
    %v626 = vunpack.c.h.b16 %v271
    %v627 = vunpack.c.l.b16 %v272
    %v628 = vunpack.c.h.b16 %v272
    %v629 = vunpack.c.l.b16 %v273
    %v630 = vunpack.c.h.b16 %v273
    %v631 = vunpack.c.l.b16 %v274
    %v632 = vunpack.c.h.b16 %v274
    %v633 = vunpack.c.l.b16 %v275
    %v634 = vunpack.c.h.b16 %v275
    %v635 = vunpack.c.l.b16 %v276
    %v636 = vunpack.c.h.b16 %v276
    %v637 = vunpack.c.l.b16 %v277
    %v638 = vunpack.c.h.b16 %v277
    %v639 = vunpack.c.l.b16 %v278
    %v640 = vunpack.c.h.b16 %v278
    %v641 = vunpack.c.l.b16 %v279
    %v642 = vunpack.c.h.b16 %v279
    %v643 = vunpack.c.l.b16 %v280
    %v644 = vunpack.c.h.b16 %v280
    %v645 = vunpack.c.l.b16 %v281
    %v646 = vunpack.c.h.b16 %v281
    %v647 = vunpack.c.l.b16 %v282
    %v648 = vunpack.c.h.b16 %v282
    %v649 = vunpack.c.l.b16 %v283
    %v650 = vunpack.c.h.b16 %v283
    %v651 = vunpack.c.l.b16 %v284
    %v652 = vunpack.c.h.b16 %v284
    %v653 = vunpack.c.l.b16 %v285
    %v654 = vunpack.c.h.b16 %v285
    %v655 = vunpack.c.l.b16 %v286
    %v656 = vunpack.c.h.b16 %v286
    %v657 = vunpack.c.l.b16 %v287
    %v658 = vunpack.c.h.b16 %v287
    %v659 = vunpack.c.l.b16 %v288
    %v660 = vunpack.c.h.b16 %v288
    %v661 = vunpack.c.l.b16 %v289
    %v662 = vunpack.c.h.b16 %v289
    %v663 = vunpack.c.l.b16 %v290
    %v664 = vunpack.c.h.b16 %v290
    %v665 = vunpack.c.l.b16 %v291
    %v666 = vunpack.c.h.b16 %v291
    %v667 = vunpack.c.l.b16 %v292
    %v668 = vunpack.c.h.b16 %v292
    %v669 = vunpack.c.l.b16 %v293
    %v670 = vunpack.c.h.b16 %v293
    %v671 = vunpack.c.l.b16 %v294
    %v672 = vunpack.c.h.b16 %v294
    %v673 = vunpack.c.l.b16 %v295
    %v674 = vunpack.c.h.b16 %v295
    %v675 = vunpack.c.l.b16 %v296
    %v676 = vunpack.c.h.b16 %v296
    %v677 = vunpack.c.l.b16 %v297
    %v678 = vunpack.c.h.b16 %v297
    %v679 = vunpack.c.l.b16 %v298
    %v680 = vunpack.c.h.b16 %v298
    %v681 = vunpack.c.l.b16 %v299
    %v682 = vunpack.c.h.b16 %v299
    %v683 = vunpack.c.l.b16 %v300
    %v684 = vunpack.c.h.b16 %v300
    %v685 = vunpack.c.l.b16 %v301
    %v686 = vunpack.c.h.b16 %v301
    %v687 = vunpack.c.l.b16 %v302
    %v688 = vunpack.c.h.b16 %v302
    %v689 = vunpack.c.l.b16 %v303
    %v690 = vunpack.c.h.b16 %v303
    %v691 = vunpack.c.l.b16 %v304
    %v692 = vunpack.c.h.b16 %v304
    %v693 = vunpack.c.l.b16 %v305
    %v694 = vunpack.c.h.b16 %v305
    %v695 = vunpack.c.l.b16 %v306
    %v696 = vunpack.c.h.b16 %v306
    %v697 = vunpack.c.l.b16 %v307
    %v698 = vunpack.c.h.b16 %v307
    %v699 = vunpack.c.l.b16 %v308
    %v700 = vunpack.c.h.b16 %v308
    %v701 = vunpack.c.l.b16 %v309
    %v702 = vunpack.c.h.b16 %v309
    %v703 = vunpack.c.l.b16 %v310
    %v704 = vunpack.c.h.b16 %v310
    %v705 = vunpack.c.l.b16 %v311
    %v706 = vunpack.c.h.b16 %v311
    %v707 = vunpack.c.l.b16 %v312
    %v708 = vunpack.c.h.b16 %v312
    %v709 = vpack.c.b16 %v455, %v453
    %v710 = vpack.c.b16 %v456, %v454
    %v711 = vpack.c.b16 %v459, %v457
    %v712 = vpack.c.b16 %v460, %v458
    %v713 = vpack.c.b16 %v463, %v461
    %v714 = vpack.c.b16 %v464, %v462
    %v715 = vpack.c.b16 %v467, %v465
    %v716 = vpack.c.b16 %v468, %v466
    %v717 = vpack.c.b16 %v471, %v469
    %v718 = vpack.c.b16 %v472, %v470
    %v719 = vpack.c.b16 %v475, %v473
    %v720 = vpack.c.b16 %v476, %v474
    %v721 = vpack.c.b16 %v479, %v477
    %v722 = vpack.c.b16 %v480, %v478
    %v723 = vpack.c.b16 %v483, %v481
    %v724 = vpack.c.b16 %v484, %v482
    %v725 = vpack.c.b16 %v487, %v485
    %v726 = vpack.c.b16 %v488, %v486
    %v727 = vpack.c.b16 %v491, %v489
    %v728 = vpack.c.b16 %v492, %v490
    %v729 = vpack.c.b16 %v495, %v493
    %v730 = vpack.c.b16 %v496, %v494
    %v731 = vpack.c.b16 %v499, %v497
    %v732 = vpack.c.b16 %v500, %v498
    %v733 = vpack.c.b16 %v503, %v501
    %v734 = vpack.c.b16 %v504, %v502
    %v735 = vpack.c.b16 %v507, %v505
    %v736 = vpack.c.b16 %v508, %v506
    %v737 = vpack.c.b16 %v511, %v509
    %v738 = vpack.c.b16 %v512, %v510
    %v739 = vpack.c.b16 %v515, %v513
    %v740 = vpack.c.b16 %v516, %v514
    %v741 = vpack.c.b16 %v519, %v517
    %v742 = vpack.c.b16 %v520, %v518
    %v743 = vpack.c.b16 %v523, %v521
    %v744 = vpack.c.b16 %v524, %v522
    %v745 = vpack.c.b16 %v527, %v525
    %v746 = vpack.c.b16 %v528, %v526
    %v747 = vpack.c.b16 %v531, %v529
    %v748 = vpack.c.b16 %v532, %v530
    %v749 = vpack.c.b16 %v535, %v533
    %v750 = vpack.c.b16 %v536, %v534
    %v751 = vpack.c.b16 %v539, %v537
    %v752 = vpack.c.b16 %v540, %v538
    %v753 = vpack.c.b16 %v543, %v541
    %v754 = vpack.c.b16 %v544, %v542
    %v755 = vpack.c.b16 %v547, %v545
    %v756 = vpack.c.b16 %v548, %v546
    %v757 = vpack.c.b16 %v551, %v549
    %v758 = vpack.c.b16 %v552, %v550
    %v759 = vpack.c.b16 %v555, %v553
    %v760 = vpack.c.b16 %v556, %v554
    %v761 = vpack.c.b16 %v559, %v557
    %v762 = vpack.c.b16 %v560, %v558
    %v763 = vpack.c.b16 %v563, %v561
    %v764 = vpack.c.b16 %v564, %v562
    %v765 = vpack.c.b16 %v567, %v565
    %v766 = vpack.c.b16 %v568, %v566
    %v767 = vpack.c.b16 %v571, %v569
    %v768 = vpack.c.b16 %v572, %v570
    %v769 = vpack.c.b16 %v575, %v573
    %v770 = vpack.c.b16 %v576, %v574
    %v771 = vpack.c.b16 %v579, %v577
    %v772 = vpack.c.b16 %v580, %v578
    %v773 = vpack.c.b16 %v583, %v581
    %v774 = vpack.c.b16 %v584, %v582
    %v775 = vpack.c.b16 %v587, %v585
    %v776 = vpack.c.b16 %v588, %v586
    %v777 = vpack.c.b16 %v591, %v589
    %v778 = vpack.c.b16 %v592, %v590
    %v779 = vpack.c.b16 %v595, %v593
    %v780 = vpack.c.b16 %v596, %v594
    %v781 = vpack.c.b16 %v599, %v597
    %v782 = vpack.c.b16 %v600, %v598
    %v783 = vpack.c.b16 %v603, %v601
    %v784 = vpack.c.b16 %v604, %v602
    %v785 = vpack.c.b16 %v607, %v605
    %v786 = vpack.c.b16 %v608, %v606
    %v787 = vpack.c.b16 %v611, %v609
    %v788 = vpack.c.b16 %v612, %v610
    %v789 = vpack.c.b16 %v615, %v613
    %v790 = vpack.c.b16 %v616, %v614
    %v791 = vpack.c.b16 %v619, %v617
    %v792 = vpack.c.b16 %v620, %v618
    %v793 = vpack.c.b16 %v623, %v621
    %v794 = vpack.c.b16 %v624, %v622
    %v795 = vpack.c.b16 %v627, %v625
    %v796 = vpack.c.b16 %v628, %v626
    %v797 = vpack.c.b16 %v631, %v629
    %v798 = vpack.c.b16 %v632, %v630
    %v799 = vpack.c.b16 %v635, %v633
    %v800 = vpack.c.b16 %v636, %v634
    %v801 = vpack.c.b16 %v639, %v637
    %v802 = vpack.c.b16 %v640, %v638
    %v803 = vpack.c.b16 %v643, %v641
    %v804 = vpack.c.b16 %v644, %v642
    %v805 = vpack.c.b16 %v647, %v645
    %v806 = vpack.c.b16 %v648, %v646
    %v807 = vpack.c.b16 %v651, %v649
    %v808 = vpack.c.b16 %v652, %v650
    %v809 = vpack.c.b16 %v655, %v653
    %v810 = vpack.c.b16 %v656, %v654
    %v811 = vpack.c.b16 %v659, %v657
    %v812 = vpack.c.b16 %v660, %v658
    %v813 = vpack.c.b16 %v663, %v661
    %v814 = vpack.c.b16 %v664, %v662
    %v815 = vpack.c.b16 %v667, %v665
    %v816 = vpack.c.b16 %v668, %v666
    %v817 = vpack.c.b16 %v671, %v669
    %v818 = vpack.c.b16 %v672, %v670
    %v819 = vpack.c.b16 %v675, %v673
    %v820 = vpack.c.b16 %v676, %v674
    %v821 = vpack.c.b16 %v679, %v677
    %v822 = vpack.c.b16 %v680, %v678
    %v823 = vpack.c.b16 %v683, %v681
    %v824 = vpack.c.b16 %v684, %v682
    %v825 = vpack.c.b16 %v687, %v685
    %v826 = vpack.c.b16 %v688, %v686
    %v827 = vpack.c.b16 %v691, %v689
    %v828 = vpack.c.b16 %v692, %v690
    %v829 = vpack.c.b16 %v695, %v693
    %v830 = vpack.c.b16 %v696, %v694
    %v831 = vpack.c.b16 %v699, %v697
    %v832 = vpack.c.b16 %v700, %v698
    %v833 = vpack.c.b16 %v703, %v701
    %v834 = vpack.c.b16 %v704, %v702
    %v835 = vpack.c.b16 %v707, %v705
    %v836 = vpack.c.b16 %v708, %v706
    %965 = vmatprep.subr.bf16.mxu0 %v710
    %966 = vmatpush1.bf16.msra.mxu0 %v709
    %967 = vmatprep.subr.bf16.mxu0 %v712
    %968 = vmatpush1.bf16.msra.mxu0 %v711
    %969 = vmatprep.subr.bf16.mxu0 %v714
    %970 = vmatpush1.bf16.msra.mxu0 %v713
    %971 = vmatprep.subr.bf16.mxu0 %v716
    %972 = vmatpush1.bf16.msra.mxu0 %v715
    %973 = vmatprep.subr.bf16.mxu0 %v718
    %974 = vmatpush1.bf16.msra.mxu0 %v717
    %975 = vmatprep.subr.bf16.mxu0 %v720
    %976 = vmatpush1.bf16.msra.mxu0 %v719
    %977 = vmatprep.subr.bf16.mxu0 %v722
    %978 = vmatpush1.bf16.msra.mxu0 %v721
    %979 = vmatprep.subr.bf16.mxu0 %v724
    %980 = vmatpush1.bf16.msra.mxu0 %v723
    %981 = vmatprep.subr.bf16.mxu0 %v726
    %982 = vmatpush1.bf16.msra.mxu0 %v725
    %983 = vmatprep.subr.bf16.mxu0 %v728
    %984 = vmatpush1.bf16.msra.mxu0 %v727
    %985 = vmatprep.subr.bf16.mxu0 %v730
    %986 = vmatpush1.bf16.msra.mxu0 %v729
    %987 = vmatprep.subr.bf16.mxu0 %v732
    %988 = vmatpush1.bf16.msra.mxu0 %v731
    %989 = vmatprep.subr.bf16.mxu0 %v734
    %990 = vmatpush1.bf16.msra.mxu0 %v733
    %991 = vmatprep.subr.bf16.mxu0 %v736
    %992 = vmatpush1.bf16.msra.mxu0 %v735
    %993 = vmatprep.subr.bf16.mxu0 %v738
    %994 = vmatpush1.bf16.msra.mxu0 %v737
    %995 = vmatprep.subr.bf16.mxu0 %v740
    %996 = vmatpush1.bf16.msra.mxu0 %v739
    %997 = vmatprep.mubr.bf16.mxu0 %v178
    %998 = vmatmul.mubr.bf16.gmra.mrb[0].mxu0 %v177
    %v999 = vpop.f32.mrb[0].mxu0
    %v1000 = vadd.f32 %v318, %v999
    %v1001 = vpop.f32.mrb[0].mxu0
    %v1002 = vadd.f32 %v322, %v1001
    %v1003 = vpop.f32.mrb[0].mxu0
    %v1004 = vadd.f32 %v318, %v1003
    %v1005 = vpop.f32.mrb[0].mxu0
    %v1006 = vadd.f32 %v322, %v1005
    %1007 = vdwg.mxu0
    %1008 = vmatprep.subr.bf16.mxu0 %v742
    %1009 = vmatpush1.bf16.msra.mxu0 %v741
    %1010 = vmatprep.subr.bf16.mxu0 %v744
    %1011 = vmatpush1.bf16.msra.mxu0 %v743
    %1012 = vmatprep.subr.bf16.mxu0 %v746
    %1013 = vmatpush1.bf16.msra.mxu0 %v745
    %1014 = vmatprep.subr.bf16.mxu0 %v748
    %1015 = vmatpush1.bf16.msra.mxu0 %v747
    %1016 = vmatprep.subr.bf16.mxu0 %v750
    %1017 = vmatpush1.bf16.msra.mxu0 %v749
    %1018 = vmatprep.subr.bf16.mxu0 %v752
    %1019 = vmatpush1.bf16.msra.mxu0 %v751
    %1020 = vmatprep.subr.bf16.mxu0 %v754
    %1021 = vmatpush1.bf16.msra.mxu0 %v753
    %1022 = vmatprep.subr.bf16.mxu0 %v756
    %1023 = vmatpush1.bf16.msra.mxu0 %v755
    %1024 = vmatprep.subr.bf16.mxu0 %v758
    %1025 = vmatpush1.bf16.msra.mxu0 %v757
    %1026 = vmatprep.subr.bf16.mxu0 %v760
    %1027 = vmatpush1.bf16.msra.mxu0 %v759
    %1028 = vmatprep.subr.bf16.mxu0 %v762
    %1029 = vmatpush1.bf16.msra.mxu0 %v761
    %1030 = vmatprep.subr.bf16.mxu0 %v764
    %1031 = vmatpush1.bf16.msra.mxu0 %v763
    %1032 = vmatprep.subr.bf16.mxu0 %v766
    %1033 = vmatpush1.bf16.msra.mxu0 %v765
    %1034 = vmatprep.subr.bf16.mxu0 %v768
    %1035 = vmatpush1.bf16.msra.mxu0 %v767
    %1036 = vmatprep.subr.bf16.mxu0 %v770
    %1037 = vmatpush1.bf16.msra.mxu0 %v769
    %1038 = vmatprep.subr.bf16.mxu0 %v772
    %1039 = vmatpush1.bf16.msra.mxu0 %v771
    %1040 = vmatprep.mubr.bf16.mxu0 %v180
    %1041 = vmatmul.mubr.bf16.gmra.mrb[0].mxu0 %v179
    %v1042 = vpop.f32.mrb[0].mxu0
    %v1043 = vadd.f32 %v1000, %v1042
    %v1044 = vpop.f32.mrb[0].mxu0
    %v1045 = vadd.f32 %v1002, %v1044
    %v1046 = vpop.f32.mrb[0].mxu0
    %v1047 = vadd.f32 %v1004, %v1046
    %v1048 = vpop.f32.mrb[0].mxu0
    %v1049 = vadd.f32 %v1006, %v1048
    %1050 = vdwg.mxu0
    %1051 = vmatprep.subr.bf16.mxu0 %v774
    %1052 = vmatpush1.bf16.msra.mxu0 %v773
    %1053 = vmatprep.subr.bf16.mxu0 %v776
    %1054 = vmatpush1.bf16.msra.mxu0 %v775
    %1055 = vmatprep.subr.bf16.mxu0 %v778
    %1056 = vmatpush1.bf16.msra.mxu0 %v777
    %1057 = vmatprep.subr.bf16.mxu0 %v780
    %1058 = vmatpush1.bf16.msra.mxu0 %v779
    %1059 = vmatprep.subr.bf16.mxu0 %v782
    %1060 = vmatpush1.bf16.msra.mxu0 %v781
    %1061 = vmatprep.subr.bf16.mxu0 %v784
    %1062 = vmatpush1.bf16.msra.mxu0 %v783
    %1063 = vmatprep.subr.bf16.mxu0 %v786
    %1064 = vmatpush1.bf16.msra.mxu0 %v785
    %1065 = vmatprep.subr.bf16.mxu0 %v788
    %1066 = vmatpush1.bf16.msra.mxu0 %v787
    %1067 = vmatprep.subr.bf16.mxu0 %v790
    %1068 = vmatpush1.bf16.msra.mxu0 %v789
    %1069 = vmatprep.subr.bf16.mxu0 %v792
    %1070 = vmatpush1.bf16.msra.mxu0 %v791
    %1071 = vmatprep.subr.bf16.mxu0 %v794
    %1072 = vmatpush1.bf16.msra.mxu0 %v793
    %1073 = vmatprep.subr.bf16.mxu0 %v796
    %1074 = vmatpush1.bf16.msra.mxu0 %v795
    %1075 = vmatprep.subr.bf16.mxu0 %v798
    %1076 = vmatpush1.bf16.msra.mxu0 %v797
    %1077 = vmatprep.subr.bf16.mxu0 %v800
    %1078 = vmatpush1.bf16.msra.mxu0 %v799
    %1079 = vmatprep.subr.bf16.mxu0 %v802
    %1080 = vmatpush1.bf16.msra.mxu0 %v801
    %1081 = vmatprep.subr.bf16.mxu0 %v804
    %1082 = vmatpush1.bf16.msra.mxu0 %v803
    %1083 = vmatprep.mubr.bf16.mxu0 %v182
    %1084 = vmatmul.mubr.bf16.gmra.mrb[0].mxu0 %v181
    %v1085 = vpop.f32.mrb[0].mxu0
    %v1086 = vadd.f32 %v1043, %v1085
    %v1087 = vpop.f32.mrb[0].mxu0
    %v1088 = vadd.f32 %v1045, %v1087
    %v1089 = vpop.f32.mrb[0].mxu0
    %v1090 = vadd.f32 %v1047, %v1089
    %v1091 = vpop.f32.mrb[0].mxu0
    %v1092 = vadd.f32 %v1049, %v1091
    %1093 = vdwg.mxu0
    %1094 = vmatprep.subr.bf16.mxu0 %v806
    %1095 = vmatpush1.bf16.msra.mxu0 %v805
    %1096 = vmatprep.subr.bf16.mxu0 %v808
    %1097 = vmatpush1.bf16.msra.mxu0 %v807
    %1098 = vmatprep.subr.bf16.mxu0 %v810
    %1099 = vmatpush1.bf16.msra.mxu0 %v809
    %1100 = vmatprep.subr.bf16.mxu0 %v812
    %1101 = vmatpush1.bf16.msra.mxu0 %v811
    %1102 = vmatprep.subr.bf16.mxu0 %v814
    %1103 = vmatpush1.bf16.msra.mxu0 %v813
    %1104 = vmatprep.subr.bf16.mxu0 %v816
    %1105 = vmatpush1.bf16.msra.mxu0 %v815
    %1106 = vmatprep.subr.bf16.mxu0 %v818
    %1107 = vmatpush1.bf16.msra.mxu0 %v817
    %1108 = vmatprep.subr.bf16.mxu0 %v820
    %1109 = vmatpush1.bf16.msra.mxu0 %v819
    %1110 = vmatprep.subr.bf16.mxu0 %v822
    %1111 = vmatpush1.bf16.msra.mxu0 %v821
    %1112 = vmatprep.subr.bf16.mxu0 %v824
    %1113 = vmatpush1.bf16.msra.mxu0 %v823
    %1114 = vmatprep.subr.bf16.mxu0 %v826
    %1115 = vmatpush1.bf16.msra.mxu0 %v825
    %1116 = vmatprep.subr.bf16.mxu0 %v828
    %1117 = vmatpush1.bf16.msra.mxu0 %v827
    %1118 = vmatprep.subr.bf16.mxu0 %v830
    %1119 = vmatpush1.bf16.msra.mxu0 %v829
    %1120 = vmatprep.subr.bf16.mxu0 %v832
    %1121 = vmatpush1.bf16.msra.mxu0 %v831
    %1122 = vmatprep.subr.bf16.mxu0 %v834
    %1123 = vmatpush1.bf16.msra.mxu0 %v833
    %1124 = vmatprep.subr.bf16.mxu0 %v836
    %1125 = vmatpush1.bf16.msra.mxu0 %v835
    %1126 = vmatprep.mubr.bf16.mxu0 %v184
    %1127 = vmatmul.mubr.bf16.gmra.mrb[0].mxu0 %v183
    %v1128 = vpop.f32.mrb[0].mxu0
    %v1129 = vadd.f32 %v1086, %v1128
    %v1130 = vpop.f32.mrb[0].mxu0
    %v1131 = vadd.f32 %v1088, %v1130
    %v1132 = vpop.f32.mrb[0].mxu0
    %v1133 = vadd.f32 %v1090, %v1132
    %v1134 = vpop.f32.mrb[0].mxu0
    %v1135 = vadd.f32 %v1092, %v1134
    %1136 = vdwg.mxu0
    %v1137 = vmul.f32 %v1129, 0.01
    %v1138 = vmul.f32 %v1131, 0.01
    %v1139 = vmul.f32 %v1133, 0.01
    %v1140 = vmul.f32 %v1135, 0.01
    %v1141 = vmax.f32 %v1129, %v1137
    %v1142 = vmax.f32 %v1131, %v1138
    %v1143 = vmax.f32 %v1133, %v1139
    %v1144 = vmax.f32 %v1135, %v1140
    %v1145 = vadd.f32 %v1141, %v1142
    %1146 = vadd.xlane.f32.xlu0 %v1145
    %v1147 = vpop.xlane.xlu0 %1146
    %v1148 = vadd.f32 %v1143, %v1144
    %1149 = vadd.xlane.f32.xlu0 %v1148
    %v1150 = vpop.xlane.xlu0 %1149
    %v1151 = vmul.f32 %v1147, 0.005
    %v1152 = vmul.f32 %v1150, 0.005
    %v1153 = vmul.f32 %v1141, %v1141
    %v1154 = vmul.f32 %v1142, %v1142
    %v1155 = vmul.f32 %v1143, %v1143
    %v1156 = vmul.f32 %v1144, %v1144
    %v1157 = vadd.f32 %v1153, %v1154
    %1158 = vadd.xlane.f32.xlu0 %v1157
    %v1159 = vpop.xlane.xlu0 %1158
    %v1160 = vadd.f32 %v1155, %v1156
    %1161 = vadd.xlane.f32.xlu0 %v1160
    %v1162 = vpop.xlane.xlu0 %1161
    %v1163 = vmul.f32 %v1159, 0.005
    %v1164 = vmul.f32 %v1162, 0.005
    %v1165 = vmul.f32 %v1151, %v1151
    %v1166 = vmul.f32 %v1152, %v1152
    %v1167 = vsub.f32 %v1163, %v1165
    %v1168 = vsub.f32 %v1164, %v1166
    %v1169 = vmax.f32 %v1167, 0.0
    %v1170 = vmax.f32 %v1168, 0.0
    %v1171 = vsub.f32 %v1141, %v1151
    %v1172 = vsub.f32 %v1142, %v1151
    %v1173 = vsub.f32 %v1143, %v1152
    %v1174 = vsub.f32 %v1144, %v1152
    %v1175 = vadd.f32 %v1169, 1e-05
    %v1176 = vadd.f32 %v1170, 1e-05
    %v1177 = vrsqrt.pop %v1175
    %v1178 = vrsqrt.pop %v1176
    %v1179 = vmul.f32 %v1171, %v1177
    %v1180 = vmul.f32 %v1172, %v1177
    %v1181 = vmul.f32 %v1173, %v1178
    %v1182 = vmul.f32 %v1174, %v1178
    %v1183 = vpack.c.bf16 %v1181, %v1179
    %v1184 = vpack.c.bf16 %v1182, %v1180
    %v1185 = vld [vmem:[#allocation7] sm:$0xf]
    %v1186 = vld [vmem:[#allocation7 + $0x4] sm:$0xf]
    %v1187 = vld [vmem:[#allocation7 + $0x8] sm:$0xf]
    %v1188 = vld [vmem:[#allocation7 + $0xc] sm:$0xf]
    %v1189 = vld [vmem:[#allocation7 + $0x10] sm:$0xf]
    %v1190 = vld [vmem:[#allocation7 + $0x14] sm:$0xf]
    %v1191 = vld [vmem:[#allocation7 + $0x18] sm:$0xf]
    %v1192 = vld [vmem:[#allocation7 + $0x1c] sm:$0xf]
    %v1193 = vld [vmem:[#allocation7 + $0x20] sm:$0xf]
    %v1194 = vld [vmem:[#allocation7 + $0x24] sm:$0xf]
    %v1195 = vld [vmem:[#allocation7 + $0x28] sm:$0xf]
    %v1196 = vld [vmem:[#allocation7 + $0x2c] sm:$0xf]
    %v1197 = vld [vmem:[#allocation7 + $0x30] sm:$0xf]
    %v1198 = vld [vmem:[#allocation7 + $0x34] sm:$0xf]
    %v1199 = vld [vmem:[#allocation7 + $0x38] sm:$0xf]
    %v1200 = vld [vmem:[#allocation7 + $0x3c] sm:$0xf]
    %v1201 = vld [vmem:[#allocation7 + $0x40] sm:$0xf]
    %v1202 = vld [vmem:[#allocation7 + $0x44] sm:$0xf]
    %v1203 = vld [vmem:[#allocation7 + $0x48] sm:$0xf]
    %v1204 = vld [vmem:[#allocation7 + $0x4c] sm:$0xf]
    %v1205 = vld [vmem:[#allocation7 + $0x50] sm:$0xf]
    %v1206 = vld [vmem:[#allocation7 + $0x54] sm:$0xf]
    %v1207 = vld [vmem:[#allocation7 + $0x58] sm:$0xf]
    %v1208 = vld [vmem:[#allocation7 + $0x5c] sm:$0xf]
    %v1209 = vld [vmem:[#allocation7 + $0x60] sm:$0xf]
    %v1210 = vld [vmem:[#allocation7 + $0x64] sm:$0xf]
    %v1211 = vld [vmem:[#allocation7 + $0x68] sm:$0xf]
    %v1212 = vld [vmem:[#allocation7 + $0x6c] sm:$0xf]
    %v1213 = vld [vmem:[#allocation7 + $0x70] sm:$0xf]
    %v1214 = vld [vmem:[#allocation7 + $0x74] sm:$0xf]
    %v1215 = vld [vmem:[#allocation7 + $0x78] sm:$0xf]
    %v1216 = vld [vmem:[#allocation7 + $0x7c] sm:$0xf]
    %v1217 = vld [vmem:[%s4] sm:$0x1]
    %v1219 = vlaneseq
    %v1220 = vshrl.u32 %v1219, 7
    %v1221 = vsub.s32 0, %v1220
    %v1222 = vrot.slane %v1217, %v1221
    %v1256 = vunpack.c.l.b16 %v1185
    %v1257 = vunpack.c.l.b16 %v1186
    %v1258 = vunpack.c.l.b16 %v1187
    %v1259 = vunpack.c.l.b16 %v1188
    %v1260 = vunpack.c.l.b16 %v1189
    %v1261 = vunpack.c.l.b16 %v1190
    %v1262 = vunpack.c.l.b16 %v1191
    %v1263 = vunpack.c.l.b16 %v1192
    %v1264 = vunpack.c.l.b16 %v1193
    %v1265 = vunpack.c.l.b16 %v1194
    %v1266 = vunpack.c.l.b16 %v1195
    %v1267 = vunpack.c.l.b16 %v1196
    %v1268 = vunpack.c.l.b16 %v1197
    %v1269 = vunpack.c.l.b16 %v1198
    %v1270 = vunpack.c.l.b16 %v1199
    %v1271 = vunpack.c.l.b16 %v1200
    %v1272 = vunpack.c.l.b16 %v1201
    %v1273 = vunpack.c.l.b16 %v1202
    %v1274 = vunpack.c.l.b16 %v1203
    %v1275 = vunpack.c.l.b16 %v1204
    %v1276 = vunpack.c.l.b16 %v1205
    %v1277 = vunpack.c.l.b16 %v1206
    %v1278 = vunpack.c.l.b16 %v1207
    %v1279 = vunpack.c.l.b16 %v1208
    %v1280 = vunpack.c.l.b16 %v1209
    %v1281 = vunpack.c.l.b16 %v1210
    %v1282 = vunpack.c.l.b16 %v1211
    %v1283 = vunpack.c.l.b16 %v1212
    %v1284 = vunpack.c.l.b16 %v1213
    %v1285 = vunpack.c.l.b16 %v1214
    %v1286 = vunpack.c.l.b16 %v1215
    %v1287 = vunpack.c.l.b16 %v1216
    %v1288 = vpack.c.b16 %v1257, %v1256
    %v1289 = vpack.c.b16 %v1259, %v1258
    %v1290 = vpack.c.b16 %v1261, %v1260
    %v1291 = vpack.c.b16 %v1263, %v1262
    %v1292 = vpack.c.b16 %v1265, %v1264
    %v1293 = vpack.c.b16 %v1267, %v1266
    %v1294 = vpack.c.b16 %v1269, %v1268
    %v1295 = vpack.c.b16 %v1271, %v1270
    %v1296 = vpack.c.b16 %v1273, %v1272
    %v1297 = vpack.c.b16 %v1275, %v1274
    %v1298 = vpack.c.b16 %v1277, %v1276
    %v1299 = vpack.c.b16 %v1279, %v1278
    %v1300 = vpack.c.b16 %v1281, %v1280
    %v1301 = vpack.c.b16 %v1283, %v1282
    %v1302 = vpack.c.b16 %v1285, %v1284
    %v1303 = vpack.c.b16 %v1287, %v1286
    %1320 = vmatprep.subr.bf16.mxu0 0
    %1321 = vmatpush1.bf16.msra.mxu0 %v1288
    %1322 = vmatprep.subr.bf16.mxu0 0
    %1323 = vmatpush1.bf16.msra.mxu0 %v1289
    %1324 = vmatprep.subr.bf16.mxu0 0
    %1325 = vmatpush1.bf16.msra.mxu0 %v1290
    %1326 = vmatprep.subr.bf16.mxu0 0
    %1327 = vmatpush1.bf16.msra.mxu0 %v1291
    %1328 = vmatprep.subr.bf16.mxu0 0
    %1329 = vmatpush1.bf16.msra.mxu0 %v1292
    %1330 = vmatprep.subr.bf16.mxu0 0
    %1331 = vmatpush1.bf16.msra.mxu0 %v1293
    %1332 = vmatprep.subr.bf16.mxu0 0
    %1333 = vmatpush1.bf16.msra.mxu0 %v1294
    %1334 = vmatprep.subr.bf16.mxu0 0
    %1335 = vmatpush1.bf16.msra.mxu0 %v1295
    %1336 = vmatprep.subr.bf16.mxu0 0
    %1337 = vmatpush1.bf16.msra.mxu0 %v1296
    %1338 = vmatprep.subr.bf16.mxu0 0
    %1339 = vmatpush1.bf16.msra.mxu0 %v1297
    %1340 = vmatprep.subr.bf16.mxu0 0
    %1341 = vmatpush1.bf16.msra.mxu0 %v1298
    %1342 = vmatprep.subr.bf16.mxu0 0
    %1343 = vmatpush1.bf16.msra.mxu0 %v1299
    %1344 = vmatprep.subr.bf16.mxu0 0
    %1345 = vmatpush1.bf16.msra.mxu0 %v1300
    %1346 = vmatprep.subr.bf16.mxu0 0
    %1347 = vmatpush1.bf16.msra.mxu0 %v1301
    %1348 = vmatprep.subr.bf16.mxu0 0
    %1349 = vmatpush1.bf16.msra.mxu0 %v1302
    %1350 = vmatprep.subr.bf16.mxu0 0
    %1351 = vmatpush1.bf16.msra.mxu0 %v1303
    %1352 = vmatprep.mubr.bf16.mxu0 %v1184
    %1353 = vmatmul.mubr.bf16.gmra.mrb[0].mxu0 %v1183
    %v1354 = vpop.f32.mrb[0].mxu0
    %v1355 = vadd.f32 %v1222, %v1354
    %v1356 = vpop.f32.mrb[0].mxu0
    %v1357 = vpop.f32.mrb[0].mxu0
    %v1358 = vadd.f32 %v1222, %v1357
    %v1359 = vpop.f32.mrb[0].mxu0
    %1360 = vdwg.mxu0
    %v1361 = vmul.f32 %v1355, 0.01
    %v1362 = vmul.f32 %v1358, 0.01
    %v1363 = vmax.f32 %v1355, %v1361
    %v1364 = vmax.f32 %v1358, %v1362
    %v1365 = vpack.c.bf16 %v1364, %v1363
    %v1367 = vunpack.c.l.b16 %v1365
    %v1368 = vunpack.c.h.b16 %v1365
    %v1369 = vpack.c.b16 %v1367, %v1367
    %v1370 = vpack.c.b16 %v1368, %v1368
    %1373 = vst [vmem:[#allocation8] sm:$0xf] %v1369
    %1374 = vst [vmem:[#allocation8 + $0x4] sm:$0xf] %v1370
    // Predicated region
    $region34: #{tpu_custom_call.1} parent=1 // pred_check
      _
    $region35: #{tpu_custom_call.1} parent=1 // pred_check_branch
      %1376 = sbr.rel (0) target = $region37
    $region36: #{tpu_custom_call.1} parent=1 // pred_region
      %s1378 = ssub.s32 128, 128
      %1379 = vsyncadd [#allocation4], %s1378
      %s1380 = sshll.u32 [#allocation8], 4
      %s1381 = int_to_ptr.vmem [resolvable:$true] %s1380
      %1386 = dma.vmem_to_hbm [thread:$0]  %s1381, 128, %s5, [#allocation4], 64, 64, 4
    $region37: #{tpu_custom_call.1} parent=1 // pred_fallthru
      _
    // Predicated region
    $region38: #{tpu_custom_call.1} parent=1 // pred_check
      _
    $region39: #{tpu_custom_call.1} parent=1 // pred_check_branch
      %1388 = sbr.rel (0) target = $region41
    $region40: #{tpu_custom_call.1} parent=1 // pred_region
      %1389 = dma.done [#allocation4], 128
    $region41: #{tpu_custom_call.1} parent=1 // pred_fallthru
      _
    %1390 = vsyncpa [#allocation3], 1
    %1391 = vsyncpa [#allocation6], 1
    %1392 = vsyncpa [#allocation4], 1

</llo_original>
